<compile_context>
chip_gen: v7x
topology: tpu7x:2x2x1
jax: 0.10.0
libtpu: 0.0.40
codegen_flags: <defaults>
</compile_context>

<pallas_src>
import functools

import jax
import jax.numpy as jnp
from jax import lax
from jax.experimental import pallas as pl
from jax.experimental.pallas import tpu as pltpu


def _focal_loss_kernel(preds_ref, labels_ref, out_ref, *, weight, gamma, n_valid):
    """One (C, TN) tile of transposed logits + (1, TN) labels -> (1, 1, 128) partial sum.

    preds_ref : (C, TN)  input dtype; classes on sublanes, samples on lanes
    labels_ref: (1, TN)  int8/int32 labels
    out_ref   : (1, 1, 128) f32; this tile's partial focal-loss sum, broadcast
    """
    c, tn = preds_ref.shape
    tile = pl.program_id(0)

    lab = labels_ref[...].astype(jnp.int32)                      # (1, TN)

    def row(cls):
        # Lane-dense (1, TN) class row: a plain vector load at a static
        # sublane offset of the already-DMA'd tile (no relayouts).
        return preds_ref[pl.ds(cls, 1), :].astype(jnp.float32)

    # Streaming max over the C class rows (VPU maximum chain).
    m = row(0)
    for cls in range(1, c):
        m = jnp.maximum(m, row(cls))

    # shifted[c] = x_c - m is reused for both sum-exp and the label gather.
    shifted = [row(cls) - m for cls in range(c)]

    sumexp = jnp.exp(shifted[0])
    for cls in range(1, c):
        sumexp = sumexp + jnp.exp(shifted[cls])
    lse = jnp.log(sumexp)                                        # (1, TN)

    # torch.gather(log_softmax, 1, labels) + weight[labels] via C static,
    # lane-dense selects. Out-of-range labels keep wsel == 0 -> contribute 0
    # (same "silently dropped" semantics as before).
    gathered = jnp.zeros_like(m)                                 # x[label] - m
    wsel = jnp.zeros_like(m)
    for cls in range(c):
        is_cls = lab == cls
        gathered = jnp.where(is_cls, shifted[cls], gathered)
        wsel = jnp.where(is_cls, jnp.float32(weight[cls]), wsel)

    logpt = gathered - lse
    ce = -logpt
    pt = jnp.exp(logpt)
    one_m_pt = 1.0 - pt

    gi = int(gamma)
    if float(gamma) == float(gi) and gi >= 0:
        # Static integer exponent: plain VPU multiplies (no pow -> exp/log on EUP).
        fw = jnp.ones_like(one_m_pt) if gi == 0 else one_m_pt
        for _ in range(gi - 1):
            fw = fw * one_m_pt
    else:
        # TODO(synk): non-integer gamma <= 0 hits 0**gamma (NaN/Inf) when pt == 1.
        fw = one_m_pt ** jnp.float32(gamma)

    term = wsel * fw * ce                                        # (1, TN)

    # Mask the ragged tail of the last tile BEFORE the reduction: the
    # out-of-bounds part of a boundary block is unspecified data.
    col = tile * tn + lax.broadcasted_iota(jnp.int32, (1, tn), 1)
    term = jnp.where(col < n_valid, term, 0.0)

    # Per-tile partial sum (cross-lane reduce on the otherwise-idle XLU),
    # broadcast into a lane-dense (1, 1, 128) output block.
    out_ref[...] = jnp.broadcast_to(jnp.sum(term), (1, 1, 128))


def _round_down_multiple(x, m):
    return max(m, (int(x) // m) * m)


def focal_loss(preds, labels, weight=(0.2, 0.3, 0.2, 0.3), gamma=2.0,
               block_n=32768):
    """preds: (N, C) float logits, labels: (N,) int. Returns scalar f32 mean focal loss."""
    n, c = preds.shape
    weight = tuple(float(w) for w in weight)
    if len(weight) != c:
        raise ValueError(f"weight length {len(weight)} != num classes {c}")

    # Sample-axis tile: a multiple of 128 lanes, or the full (possibly small /
    # non-aligned) axis when everything fits in one tile. No wrapper padding:
    # the ragged last tile is masked inside the kernel.
    block_n = _round_down_multiple(block_n, 128)
    tn = n if n <= block_n else block_n
    num_tiles = -(-n // tn)

    # Lane-dense layout: classes -> sublanes, samples -> lanes.
    # TODO(synk): fold this transpose away by reading class rows from a flat
    # (1, N*C) view with lane-strided slices once those lower reliably.
    preds_t = preds.T                                   # (C, N), original dtype
    lbl_dtype = jnp.int8 if c <= 127 else jnp.int32     # 4x less label HBM traffic
    labels_row = labels.astype(lbl_dtype).reshape(1, n)

    kernel = functools.partial(_focal_loss_kernel, weight=weight,
                               gamma=float(gamma), n_valid=n)

    # One independent partial sum per tile -> "parallel" grid axis (lets v7x
    # split tiles across both TensorCores); the tiny final sum happens in XLA.
    partials = pl.pallas_call(
        kernel,
        out_shape=jax.ShapeDtypeStruct((num_tiles, 1, 128), jnp.float32),
        grid=(num_tiles,),
        in_specs=[
            pl.BlockSpec((c, tn), lambda i: (0, i)),    # transposed logits
            pl.BlockSpec((1, tn), lambda i: (0, i)),    # labels row
        ],
        out_specs=pl.BlockSpec((1, 1, 128), lambda i: (i, 0, 0)),
        compiler_params=pltpu.CompilerParams(
            dimension_semantics=("parallel",),
            vmem_limit_bytes=32 * 1024 * 1024),
    )(preds_t, labels_row)

    return jnp.sum(partials[:, 0, 0]) * (1.0 / n)


if __name__ == "__main__":
    key = jax.random.PRNGKey(0)
    k1, k2, k3, k4 = jax.random.split(key, 4)

    w = (0.2, 0.3, 0.2, 0.3)
    gamma = 2.0

    def ref_loss(p, l):
        log_sm = jax.nn.log_softmax(p.astype(jnp.float32), axis=1)
        logpt = jnp.take_along_axis(log_sm, l[:, None], axis=1)[:, 0]
        wv = jnp.asarray(w, jnp.float32)[l]
        return jnp.mean(wv * (1.0 - jnp.exp(logpt)) ** gamma * (-logpt))

    # Small batch, 4 classes (matches the module's default weight length).
    N, C = 8, 4
    preds = jax.random.normal(k1, (N, C), dtype=jnp.float32)
    labels = jax.random.randint(k2, (N,), 0, C, dtype=jnp.int32)
    loss = focal_loss(preds, labels, weight=w, gamma=gamma)
    jax.block_until_ready(loss)
    ref = ref_loss(preds, labels)
    assert jnp.allclose(loss, ref, rtol=1e-5, atol=1e-5), (loss, ref)

    # Multi-tile path: ragged (masked) last tile + parallel per-tile partials.
    N2 = 300
    preds2 = jax.random.normal(k3, (N2, C), dtype=jnp.float32)
    labels2 = jax.random.randint(k4, (N2,), 0, C, dtype=jnp.int32)
    loss2 = focal_loss(preds2, labels2, weight=w, gamma=gamma, block_n=128)
    jax.block_until_ready(loss2)
    ref2 = ref_loss(preds2, labels2)
    assert jnp.allclose(loss2, ref2, rtol=1e-5, atol=1e-5), (loss2, ref2)

    print("KERNEL_OK")
</pallas_src>

<mosaic_0001>
module attributes {stable_mosaic.version = 11 : i64} {
  func.func @_focal_loss_kernel(%arg0: i32, %arg1: memref<4x8xf32, #tpu.memory_space<vmem>>, %arg2: memref<1x8xi8, #tpu.memory_space<vmem>>, %arg3: memref<1x1x128xf32, #tpu.memory_space<vmem>>) attributes {dimension_semantics = [#tpu.dimension_semantics<parallel>], iteration_bounds = array<i64: 1>, scalar_prefetch = 0 : i64, scratch_operands = 0 : i64, tpu.core_type = #tpu.core_type<tc>, window_params = [{transform_indices = @transform_0, window_bounds = array<i64: 4, 8>}, {transform_indices = @transform_1, window_bounds = array<i64: 1, 8>}, {transform_indices = @transform_2, window_bounds = array<i64: 1, 1, 128>}]} {
    %c0 = arith.constant 0 : index
    %c0_0 = arith.constant 0 : index
    %0 = vector.load %arg2[%c0, %c0_0] : memref<1x8xi8, #tpu.memory_space<vmem>>, vector<1x8xi8>
    %1 = arith.extsi %0 : vector<1x8xi8> to vector<1x8xi32>
    %c0_1 = arith.constant 0 : index
    %c0_2 = arith.constant 0 : index
    %2 = vector.load %arg1[%c0_1, %c0_2] : memref<4x8xf32, #tpu.memory_space<vmem>>, vector<1x8xf32>
    %c1 = arith.constant 1 : index
    %c0_3 = arith.constant 0 : index
    %3 = vector.load %arg1[%c1, %c0_3] : memref<4x8xf32, #tpu.memory_space<vmem>>, vector<1x8xf32>
    %4 = arith.maximumf %2, %3 : vector<1x8xf32>
    %c2 = arith.constant 2 : index
    %c0_4 = arith.constant 0 : index
    %5 = vector.load %arg1[%c2, %c0_4] : memref<4x8xf32, #tpu.memory_space<vmem>>, vector<1x8xf32>
    %6 = arith.maximumf %4, %5 : vector<1x8xf32>
    %c3 = arith.constant 3 : index
    %c0_5 = arith.constant 0 : index
    %7 = vector.load %arg1[%c3, %c0_5] : memref<4x8xf32, #tpu.memory_space<vmem>>, vector<1x8xf32>
    %8 = arith.maximumf %6, %7 : vector<1x8xf32>
    %c0_6 = arith.constant 0 : index
    %c0_7 = arith.constant 0 : index
    %9 = vector.load %arg1[%c0_6, %c0_7] : memref<4x8xf32, #tpu.memory_space<vmem>>, vector<1x8xf32>
    %10 = arith.subf %9, %8 : vector<1x8xf32>
    %c1_8 = arith.constant 1 : index
    %c0_9 = arith.constant 0 : index
    %11 = vector.load %arg1[%c1_8, %c0_9] : memref<4x8xf32, #tpu.memory_space<vmem>>, vector<1x8xf32>
    %12 = arith.subf %11, %8 : vector<1x8xf32>
    %c2_10 = arith.constant 2 : index
    %c0_11 = arith.constant 0 : index
    %13 = vector.load %arg1[%c2_10, %c0_11] : memref<4x8xf32, #tpu.memory_space<vmem>>, vector<1x8xf32>
    %14 = arith.subf %13, %8 : vector<1x8xf32>
    %c3_12 = arith.constant 3 : index
    %c0_13 = arith.constant 0 : index
    %15 = vector.load %arg1[%c3_12, %c0_13] : memref<4x8xf32, #tpu.memory_space<vmem>>, vector<1x8xf32>
    %16 = arith.subf %15, %8 : vector<1x8xf32>
    %17 = math.exp %10 : vector<1x8xf32>
    %18 = math.exp %12 : vector<1x8xf32>
    %19 = arith.addf %17, %18 : vector<1x8xf32>
    %20 = math.exp %14 : vector<1x8xf32>
    %21 = arith.addf %19, %20 : vector<1x8xf32>
    %22 = math.exp %16 : vector<1x8xf32>
    %23 = arith.addf %21, %22 : vector<1x8xf32>
    %24 = math.log %23 : vector<1x8xf32>
    %cst = arith.constant 0.000000e+00 : f32
    %25 = vector.broadcast %cst : f32 to vector<1x8xf32>
    %cst_14 = arith.constant 0.000000e+00 : f32
    %26 = vector.broadcast %cst_14 : f32 to vector<1x8xf32>
    %c0_i32 = arith.constant 0 : i32
    %27 = vector.broadcast %c0_i32 : i32 to vector<1x8xi32>
    %28 = arith.cmpi eq, %1, %27 : vector<1x8xi32>
    %29 = arith.select %28, %10, %25 : vector<1x8xi1>, vector<1x8xf32>
    %cst_15 = arith.constant 2.000000e-01 : f32
    %30 = vector.broadcast %cst_15 : f32 to vector<1x8xf32>
    %31 = arith.select %28, %30, %26 : vector<1x8xi1>, vector<1x8xf32>
    %c1_i32 = arith.constant 1 : i32
    %32 = vector.broadcast %c1_i32 : i32 to vector<1x8xi32>
    %33 = arith.cmpi eq, %1, %32 : vector<1x8xi32>
    %34 = arith.select %33, %12, %29 : vector<1x8xi1>, vector<1x8xf32>
    %cst_16 = arith.constant 3.000000e-01 : f32
    %35 = vector.broadcast %cst_16 : f32 to vector<1x8xf32>
    %36 = arith.select %33, %35, %31 : vector<1x8xi1>, vector<1x8xf32>
    %c2_i32 = arith.constant 2 : i32
    %37 = vector.broadcast %c2_i32 : i32 to vector<1x8xi32>
    %38 = arith.cmpi eq, %1, %37 : vector<1x8xi32>
    %39 = arith.select %38, %14, %34 : vector<1x8xi1>, vector<1x8xf32>
    %cst_17 = arith.constant 2.000000e-01 : f32
    %40 = vector.broadcast %cst_17 : f32 to vector<1x8xf32>
    %41 = arith.select %38, %40, %36 : vector<1x8xi1>, vector<1x8xf32>
    %c3_i32 = arith.constant 3 : i32
    %42 = vector.broadcast %c3_i32 : i32 to vector<1x8xi32>
    %43 = arith.cmpi eq, %1, %42 : vector<1x8xi32>
    %44 = arith.select %43, %16, %39 : vector<1x8xi1>, vector<1x8xf32>
    %cst_18 = arith.constant 3.000000e-01 : f32
    %45 = vector.broadcast %cst_18 : f32 to vector<1x8xf32>
    %46 = arith.select %43, %45, %41 : vector<1x8xi1>, vector<1x8xf32>
    %47 = arith.subf %44, %24 : vector<1x8xf32>
    %cst_19 = arith.constant 0.000000e+00 : f32
    %48 = vector.broadcast %cst_19 : f32 to vector<1x8xf32>
    %49 = arith.subf %48, %47 : vector<1x8xf32>
    %50 = math.exp %47 : vector<1x8xf32>
    %cst_20 = arith.constant 1.000000e+00 : f32
    %51 = vector.broadcast %cst_20 : f32 to vector<1x8xf32>
    %52 = arith.subf %51, %50 : vector<1x8xf32>
    %53 = arith.mulf %52, %52 : vector<1x8xf32>
    %54 = arith.mulf %46, %53 : vector<1x8xf32>
    %55 = arith.mulf %54, %49 : vector<1x8xf32>
    %c8_i32 = arith.constant 8 : i32
    %56 = arith.muli %arg0, %c8_i32 : i32
    %57 = tpu.iota {dimensions = array<i32: 1>} : vector<1x8xi32>
    %58 = vector.broadcast %56 : i32 to vector<1x8xi32>
    %59 = arith.addi %58, %57 : vector<1x8xi32>
    %c8_i32_21 = arith.constant 8 : i32
    %60 = vector.broadcast %c8_i32_21 : i32 to vector<1x8xi32>
    %61 = arith.cmpi slt, %59, %60 : vector<1x8xi32>
    %cst_22 = arith.constant 0.000000e+00 : f32
    %62 = vector.broadcast %cst_22 : f32 to vector<1x8xf32>
    %63 = arith.select %61, %55, %62 : vector<1x8xi1>, vector<1x8xf32>
    %64 = vector.shape_cast %63 : vector<1x8xf32> to vector<1x1x8xf32>
    %cst_23 = arith.constant dense<0.000000e+00> : vector<1xf32>
    %65 = vector.multi_reduction <add>, %64, %cst_23 [1, 2] : vector<1x1x8xf32> to vector<1xf32>
    %66 = vector.shape_cast %65 : vector<1xf32> to vector<1x1x1xf32>
    %67 = vector.extract %66[0, 0, 0] : f32 from vector<1x1x1xf32>
    %68 = vector.broadcast %67 : f32 to vector<1x1x128xf32>
    %c0_24 = arith.constant 0 : index
    %c0_25 = arith.constant 0 : index
    %c0_26 = arith.constant 0 : index
    %69 = vector.load %arg3[%c0_24, %c0_25, %c0_26] : memref<1x1x128xf32, #tpu.memory_space<vmem>>, vector<1x1x128xf32>
    tpu.vector_store %arg3[%c0_24, %c0_25, %c0_26], %68 {strides = array<i32>} : memref<1x1x128xf32, #tpu.memory_space<vmem>>, vector<1x1x128xf32>,
    return
  }
  func.func @transform_0(%arg0: i32) -> (i32, i32) {
    %c0_i32 = arith.constant 0 : i32
    %c0_i32_0 = arith.constant 0 : i32
    return %c0_i32, %arg0 : i32, i32
  }
  func.func @transform_1(%arg0: i32) -> (i32, i32) {
    %c0_i32 = arith.constant 0 : i32
    %c0_i32_0 = arith.constant 0 : i32
    return %c0_i32, %arg0 : i32, i32
  }
  func.func @transform_2(%arg0: i32) -> (i32, i32, i32) {
    %c0_i32 = arith.constant 0 : i32
    %c0_i32_0 = arith.constant 0 : i32
    %c0_i32_1 = arith.constant 0 : i32
    return %arg0, %c0_i32, %c0_i32_0 : i32, i32, i32
  }
}

</mosaic_0001>

<llo_original>
// kernel: tpu_custom_call.1
$region0: #{tpu_custom_call.1}
  #allocation0 [shape = 'u32[]', space=smem, size = 0x4, offset = 0x4, fixed_abs, tag = 'smem constant byte address 0x4 - core index']
  #allocation1 [shape = 'u32[144,128]{1,0:T(1,128)}', space=vmem, size = 0x12000, scoped, tag = 'internal scratch']
  %s0 = inlined_call_operand.hbm [shape: f32[4,8], index: 0, kind: input, shape index: {}]
  %s1 = inlined_call_operand.vmem [shape: s8[1,8], index: 1, kind: input, shape index: {}]
  %s2 = inlined_call_operand.hbm [shape: f32[1,1,128], index: 2, kind: output, shape index: {}]
  %s3 = sld [smem:[#allocation0]]
  $region22: #{tpu_custom_call.1} parent=0
    _
  %s5 = ssub.s32 1, %s3
  %s6 = scalar_select 0, %s5, %s3
  $region1: #{tpu_custom_call.1} parent=0
    #allocation2 [shape = 'u8[2048]{0}', space=vmem, size = 0x800, scoped, tag = 'input window, operand 0, single buffered']
    #allocation3 [shape = 's32[1]{0}', space=sflag, size = 0x4, scoped, tag = 'scoped memory for tpu_custom_call.1']
    #allocation4 [shape = 's32[1]{0}', space=sflag, size = 0x4, scoped, tag = 'scoped memory for tpu_custom_call.1']
    #allocation5 [shape = 'u8[512]{0}', space=vmem, size = 0x400, scoped, tag = 'output window, operand 0, single buffered']
    %7 = vsyncpa [#allocation3], 0
    %8 = vsyncpa [#allocation4], 0
    // Predicated region
    $region2: #{tpu_custom_call.1} parent=1 // pred_check
      _
    $region3: #{tpu_custom_call.1} parent=1 // pred_check_branch
      %10 = sbr.rel (0) target = $region5
    $region4: #{tpu_custom_call.1} parent=1 // pred_region
      %s12 = ssub.s32 64, 64
      %13 = vsyncadd [#allocation3], %s12
      %s15 = sshll.u32 [#allocation2], 4
      %s16 = int_to_ptr.vmem [resolvable:$true] %s15
      %18 = dma.hbm_to_vmem [thread:$0]  %s0, 64, %s16, [#allocation3]
    $region5: #{tpu_custom_call.1} parent=1 // pred_fallthru
      _
    // Predicated region
    $region6: #{tpu_custom_call.1} parent=1 // pred_check
      _
    $region7: #{tpu_custom_call.1} parent=1 // pred_check_branch
      %20 = sbr.rel (0) target = $region9
    $region8: #{tpu_custom_call.1} parent=1 // pred_region
      _
    $region9: #{tpu_custom_call.1} parent=1 // pred_fallthru
      _
    // Predicated region
    $region10: #{tpu_custom_call.1} parent=1 // pred_check
      _
    $region11: #{tpu_custom_call.1} parent=1 // pred_check_branch
      %22 = sbr.rel (0) target = $region13
    $region12: #{tpu_custom_call.1} parent=1 // pred_region
      %23 = dma.done [#allocation3], 64
    $region13: #{tpu_custom_call.1} parent=1 // pred_fallthru
      _
    %v24 = vld [vmem:[%s1] sm:$0x1]
    %v25 = vunpack.c.0.s8 %v24
    %v26 = vld [vmem:[#allocation2] sm:$0x1]
    %v27 = vld [vmem:[#allocation2 + $0x1] sm:$0x1]
    %v28 = vmax.f32 %v26, %v27
    %v29 = vld [vmem:[#allocation2 + $0x2] sm:$0x1]
    %v30 = vmax.f32 %v28, %v29
    %v31 = vld [vmem:[#allocation2 + $0x3] sm:$0x1]
    %v32 = vmax.f32 %v30, %v31
    %v33 = vsub.f32 %v26, %v32
    %v34 = vsub.f32 %v27, %v32
    %v35 = vsub.f32 %v29, %v32
    %v36 = vsub.f32 %v31, %v32
    %v37 = vmul.f32 %v33, 1.442695
    %v38 = vpow.pop %v37
    %v39 = vmul.f32 %v34, 1.442695
    %v40 = vpow.pop %v39
    %v41 = vadd.f32 %v38, %v40
    %v42 = vmul.f32 %v35, 1.442695
    %v43 = vpow.pop %v42
    %v44 = vadd.f32 %v41, %v43
    %v45 = vmul.f32 %v36, 1.442695
    %v46 = vpow.pop %v45
    %v47 = vadd.f32 %v44, %v46
    %v48 = vlog2.pop %v47
    %v49 = vmul.f32 %v48, 0.6931472
    %vm50 = vcmp.eq.s32.totalorder %v25, 0
    %v51 = vsel %vm50, %v33, 0.0
    %v52 = vsel %vm50, 0.2, 0.0
    %vm53 = vcmp.eq.s32.totalorder %v25, 1
    %v54 = vsel %vm53, %v34, %v51
    %v55 = vsel %vm53, 0.3, %v52
    %vm56 = vcmp.eq.s32.totalorder %v25, 2
    %v57 = vsel %vm56, %v35, %v54
    %v58 = vsel %vm56, 0.2, %v55
    %vm59 = vcmp.eq.s32.totalorder %v25, 3
    %v60 = vsel %vm59, %v36, %v57
    %v61 = vsel %vm59, 0.3, %v58
    %v62 = vsub.f32 %v60, %v49
    %v63 = vsub.f32 0.0, %v62
    %v64 = vmul.f32 %v62, 1.442695
    %v65 = vpow.pop %v64
    %v66 = vsub.f32 1.0, %v65
    %v67 = vmul.f32 %v66, %v66
    %v68 = vmul.f32 %v61, %v67
    %v69 = vmul.f32 %v68, %v63
    %s70 = smul.u32 0, 8
    %v71 = vlaneseq
    %v72 = vand.u32 %v71, 127
    %v73 = vstv %s70
    %v74 = vadd.s32 %v73, %v72
    %vm75 = vcmp.lt.s32.totalorder %v74, 8
    %v76 = vsel %vm75, %v69, 0.0
    %vm77 = vcmask 57344
    %v78 = vsel %vm77, %v76, 0.0
    %79 = vadd.xlane.f32.xlu0 %v78
    %v80 = vpop.xlane.xlu0 %79
    %v81 = vrot.slane %v80, 4
    %v82 = vadd.f32 %v80, %v81
    %v83 = vrot.slane %v82, 2
    %v84 = vadd.f32 %v82, %v83
    %v85 = vrot.slane %v84, 1
    %v86 = vadd.f32 %v84, %v85
    %s87 = vtos %v86
    %v88 = vstv %s87
    %89 = vst [vmem:[#allocation5] sm:$0x1] %v88
    // Predicated region
    $region14: #{tpu_custom_call.1} parent=1 // pred_check
      _
    $region15: #{tpu_custom_call.1} parent=1 // pred_check_branch
      %91 = sbr.rel (0) target = $region17
    $region16: #{tpu_custom_call.1} parent=1 // pred_region
      %s93 = ssub.s32 16, 16
      %94 = vsyncadd [#allocation4], %s93
      %s96 = sshll.u32 [#allocation5], 4
      %s97 = int_to_ptr.vmem [resolvable:$true] %s96
      %99 = dma.vmem_to_hbm [thread:$0]  %s97, 16, %s2, [#allocation4]
    $region17: #{tpu_custom_call.1} parent=1 // pred_fallthru
      _
    // Predicated region
    $region18: #{tpu_custom_call.1} parent=1 // pred_check
      _
    $region19: #{tpu_custom_call.1} parent=1 // pred_check_branch
      %101 = sbr.rel (0) target = $region21
    $region20: #{tpu_custom_call.1} parent=1 // pred_region
      %102 = dma.done [#allocation4], 16
    $region21: #{tpu_custom_call.1} parent=1 // pred_fallthru
      _
    %103 = vsyncpa [#allocation3], 1
    %104 = vsyncpa [#allocation4], 1

</llo_original>
